<compile_context>
chip_gen: v5e
topology: v5e:2x2
jax: 0.10.0
libtpu: 0.0.40
codegen_flags: <defaults>
</compile_context>

<pallas_src>
import jax
import jax.numpy as jnp
from jax.experimental import pallas as pl
from jax.experimental.pallas import tpu as pltpu

NEG_SLOPE = 0.01            # nn.LeakyReLU default
LANE = 128                  # TPU lane width
TILE_N_MAX = 2048           # upper bound on batch-tile rows (VMEM budget may lower it)


def _round_up(x, m):
    return ((x + m - 1) // m) * m


def _vmem_caps():
    """(vmem_limit_bytes, usable budget) per TPU generation, with safe fallback."""
    cap = 64 * 1024 * 1024                      # v7x-safe default
    try:
        info = pltpu.get_tpu_info()
        cap = int(getattr(info, "vmem_capacity_bytes", cap) or cap)
    except Exception:
        pass
    limit = min(int(cap * 3 // 4), 96 * 1024 * 1024)   # scoped limit, leave headroom
    budget = int(limit * 4 // 5)                        # what the tiler may plan for
    return limit, budget


def _pick_tiling(n, d, h_pad, c, with_loss, vmem_budget):
    """Balanced batch tiles whose footprint fits the VMEM budget."""
    # Per-row bytes: double-buffered I/O tiles + in-kernel f32/bf16 temporaries.
    per_row = 2 * (d * 2) + 2 * (c * 4)              # x (bf16), y (f32)
    if with_loss:
        per_row += 2 * (c * 4) + 2 * 4               # labels (f32), per-row loss (f32)
    per_row += h_pad * 4 + h_pad * 2 + 4 * c * 4     # h f32, h bf16, logits/softmax temps
    weights = 2 * (d * h_pad * 2 + h_pad * c * 2 + h_pad * 4 + c * 4)  # double-buffered
    avail = max(vmem_budget - weights, 1 << 20)
    cap = min(TILE_N_MAX, max(8, (avail // per_row) // 8 * 8))
    num_tiles = max(1, -(-n // cap))
    tile_n = _round_up(-(-n // num_tiles), 8)        # balanced -> little batch padding
    n_pad = _round_up(n, tile_n)
    return tile_n, n_pad


# ---------------------------------------------------------------------------
# Kernels
# ---------------------------------------------------------------------------
def _ffn_core(x_ref, w1_ref, b1_ref, w2_ref, b2_ref, *, approx_recip):
    """linear -> leaky_relu -> linear -> softmax on one batch tile (f32 epilogue)."""
    x = x_ref[...]                                            # already bf16
    h = jnp.dot(x, w1_ref[...], preferred_element_type=jnp.float32) + b1_ref[...]
    h = jnp.where(h >= 0.0, h, NEG_SLOPE * h)                 # LeakyReLU (f32, VPU)
    logits = jnp.dot(h.astype(jnp.bfloat16), w2_ref[...],
                     preferred_element_type=jnp.float32) + b2_ref[...]
    m = jnp.max(logits, axis=-1, keepdims=True)
    e = jnp.exp(logits - m)
    denom = jnp.sum(e, axis=-1, keepdims=True)
    return e * pl.reciprocal(denom, approx=approx_recip)


def ffn_pred_kernel(x_ref, w1_ref, b1_ref, w2_ref, b2_ref, y_ref):
    y_ref[...] = _ffn_core(x_ref, w1_ref, b1_ref, w2_ref, b2_ref,
                           approx_recip=True).astype(y_ref.dtype)


def ffn_pred_loss_kernel(x_ref, w1_ref, b1_ref, w2_ref, b2_ref, lbl_ref,
                         y_ref, row_loss_ref):
    """Fused forward + per-row CrossEntropyLoss(labels, y_pred) (swapped args).

    Emits per-row partial losses; the (tiny) final mean happens outside the
    kernel, so the batch grid axis stays fully parallel (v7x megacore) and the
    reduction is numerically robust for large N.
    """
    y_pred = _ffn_core(x_ref, w1_ref, b1_ref, w2_ref, b2_ref, approx_recip=False)
    y_ref[...] = y_pred.astype(y_ref.dtype)

    # labels act as logits, y_pred as probability targets.
    lbl = lbl_ref[...].astype(jnp.float32)
    lm = jnp.max(lbl, axis=-1, keepdims=True)
    lse = lm + jnp.log(jnp.sum(jnp.exp(lbl - lm), axis=-1, keepdims=True))
    log_sm = lbl - lse
    row_loss_ref[...] = -jnp.sum(y_pred * log_sm, axis=-1, keepdims=True)


# ---------------------------------------------------------------------------
# Wrappers
# ---------------------------------------------------------------------------
def prepare_params(params):
    """One-time pad of the hidden dim to a lane multiple; weights bf16, biases f32.

    Padded hidden columns of b1 / rows of w2 are zero, so they contribute
    nothing through LeakyReLU and the second matmul.  D and C stay native.
    """
    w1, b1, w2, b2 = params                   # w1:(D,H) pre-transposed, w2:(H,C)
    d, h = w1.shape
    c = w2.shape[1]
    h_pad = _round_up(h, LANE)

    w1_p = jnp.pad(w1, ((0, 0), (0, h_pad - h))).astype(jnp.bfloat16)
    b1_p = jnp.pad(b1.reshape(1, -1).astype(jnp.float32), ((0, 0), (0, h_pad - h)))
    w2_p = jnp.pad(w2, ((0, h_pad - h), (0, 0))).astype(jnp.bfloat16)
    b2_p = b2.reshape(1, -1).astype(jnp.float32)
    return (w1_p, b1_p, w2_p, b2_p, (d, h, c))


def ffn_forward(x, prepared, labels=None):
    """Returns (y_pred, loss) matching FFN.forward semantics."""
    w1_p, b1_p, w2_p, b2_p, (d, _h, c) = prepared
    n = x.shape[0]
    h_pad = w1_p.shape[1]
    with_loss = labels is not None

    vmem_limit, vmem_budget = _vmem_caps()
    tile_n, n_pad = _pick_tiling(n, d, h_pad, c, with_loss, vmem_budget)
    grid = (n_pad // tile_n,)

    x_p = x.astype(jnp.bfloat16)                       # bf16 input stream (MXU dtype)
    if n_pad != n:
        x_p = jnp.pad(x_p, ((0, n_pad - n), (0, 0)))

    # X / y tiled over batch; weights & biases as full, constant-index blocks
    # (stay VMEM-resident, not re-DMA'd per grid step).
    x_spec = pl.BlockSpec((tile_n, d), lambda i: (i, 0))
    w1_spec = pl.BlockSpec(w1_p.shape, lambda i: (0, 0))
    b1_spec = pl.BlockSpec(b1_p.shape, lambda i: (0, 0))
    w2_spec = pl.BlockSpec(w2_p.shape, lambda i: (0, 0))
    b2_spec = pl.BlockSpec(b2_p.shape, lambda i: (0, 0))
    y_spec = pl.BlockSpec((tile_n, c), lambda i: (i, 0))

    cparams = pltpu.CompilerParams(
        dimension_semantics=("parallel",),             # both paths fully parallel
        vmem_limit_bytes=vmem_limit)

    if labels is None:
        y_full = pl.pallas_call(
            ffn_pred_kernel,
            out_shape=jax.ShapeDtypeStruct((n_pad, c), jnp.float32),
            grid=grid,
            in_specs=[x_spec, w1_spec, b1_spec, w2_spec, b2_spec],
            out_specs=y_spec,
            compiler_params=cparams,
        )(x_p, w1_p, b1_p, w2_p, b2_p)
        y = y_full if n_pad == n else y_full[:n]
        return y, None

    lbl_p = labels.astype(jnp.float32)
    if n_pad != n:
        lbl_p = jnp.pad(lbl_p, ((0, n_pad - n), (0, 0)))
    lbl_spec = pl.BlockSpec((tile_n, c), lambda i: (i, 0))
    rloss_spec = pl.BlockSpec((tile_n, 1), lambda i: (i, 0))

    y_full, row_loss = pl.pallas_call(
        ffn_pred_loss_kernel,
        out_shape=(jax.ShapeDtypeStruct((n_pad, c), jnp.float32),
                   jax.ShapeDtypeStruct((n_pad, 1), jnp.float32)),
        grid=grid,
        in_specs=[x_spec, w1_spec, b1_spec, w2_spec, b2_spec, lbl_spec],
        out_specs=(y_spec, rloss_spec),
        compiler_params=cparams,
    )(x_p, w1_p, b1_p, w2_p, b2_p, lbl_p)

    y = y_full if n_pad == n else y_full[:n]
    rl = row_loss if n_pad == n else row_loss[:n]
    loss = jnp.sum(rl) / n                             # padded rows excluded above
    return y, loss


# ---------------------------------------------------------------------------
# Deterministic parameter init (mimics nn.Linear's uniform(-1/sqrt(fan_in), ..))
# ---------------------------------------------------------------------------
def init_params(key, input_dim, hidden_dim, num_classes):
    k1, k2, k3, k4 = jax.random.split(key, 4)
    bound1 = 1.0 / jnp.sqrt(input_dim)
    bound2 = 1.0 / jnp.sqrt(hidden_dim)
    # Stored pre-transposed: [in_features, out_features]
    w1 = jax.random.uniform(k1, (input_dim, hidden_dim), jnp.float32, -bound1, bound1)
    b1 = jax.random.uniform(k2, (1, hidden_dim), jnp.float32, -bound1, bound1)
    w2 = jax.random.uniform(k3, (hidden_dim, num_classes), jnp.float32, -bound2, bound2)
    b2 = jax.random.uniform(k4, (1, num_classes), jnp.float32, -bound2, bound2)
    return w1, b1, w2, b2


# Pure-JAX f32 reference for verification.
def ffn_reference(x, params, labels):
    w1, b1, w2, b2 = params
    h = x @ w1 + b1
    h = jnp.where(h >= 0, h, NEG_SLOPE * h)
    logits = h @ w2 + b2
    y_pred = jax.nn.softmax(logits, axis=-1)
    log_sm_labels = jax.nn.log_softmax(labels, axis=-1)
    loss = jnp.mean(-jnp.sum(y_pred * log_sm_labels, axis=-1))
    return y_pred, loss


if __name__ == "__main__":
    batch, input_dim, hidden_dim, num_classes = 8, 16, 32, 4

    key = jax.random.PRNGKey(0)
    kx, kl, kp = jax.random.split(key, 3)

    x = jax.random.normal(kx, (batch, input_dim), jnp.float32)
    # Probability-style labels (the module passes them as CE *input* anyway).
    labels = jax.nn.softmax(jax.random.normal(kl, (batch, num_classes), jnp.float32), -1)
    params = init_params(kp, input_dim, hidden_dim, num_classes)
    prepared = prepare_params(params)

    y_pred, loss = ffn_forward(x, prepared, labels)
    jax.block_until_ready((y_pred, loss))

    y_ref, loss_ref = ffn_reference(x, params, labels)
    # bf16 MXU operands -> compare against f32 reference with loosened tolerance.
    assert y_pred.shape == (batch, num_classes)
    assert jnp.allclose(y_pred, y_ref, atol=5e-2, rtol=5e-2), "y_pred mismatch"
    assert jnp.allclose(jnp.sum(y_pred, axis=-1), 1.0, atol=2e-2), "softmax rows != 1"
    assert jnp.allclose(loss, loss_ref, atol=5e-2, rtol=5e-2), "loss mismatch"

    # Also exercise the labels=None path (approx reciprocal).
    y_only, none_loss = ffn_forward(x, prepared, None)
    jax.block_until_ready(y_only)
    assert none_loss is None
    assert jnp.allclose(y_only, y_ref, atol=5e-2, rtol=5e-2)

    print("KERNEL_OK")
</pallas_src>

<mosaic_0001>
module attributes {stable_mosaic.version = 11 : i64} {
  func.func @ffn_pred_loss_kernel(%arg0: i32, %arg1: memref<8x16xbf16, #tpu.memory_space<vmem>>, %arg2: memref<16x128xbf16, #tpu.memory_space<vmem>>, %arg3: memref<1x128xf32, #tpu.memory_space<vmem>>, %arg4: memref<128x4xbf16, #tpu.memory_space<vmem>>, %arg5: memref<1x4xf32, #tpu.memory_space<vmem>>, %arg6: memref<8x4xf32, #tpu.memory_space<vmem>>, %arg7: memref<8x4xf32, #tpu.memory_space<vmem>>, %arg8: memref<8x1xf32, #tpu.memory_space<vmem>>) attributes {dimension_semantics = [#tpu.dimension_semantics<parallel>], iteration_bounds = array<i64: 1>, scalar_prefetch = 0 : i64, scratch_operands = 0 : i64, tpu.core_type = #tpu.core_type<tc>, window_params = [{transform_indices = @transform_0, window_bounds = array<i64: 8, 16>}, {pipeline_mode = #tpu.pipeline_mode<synchronous>, transform_indices = @transform_1, window_bounds = array<i64: 16, 128>}, {pipeline_mode = #tpu.pipeline_mode<synchronous>, transform_indices = @transform_2, window_bounds = array<i64: 1, 128>}, {pipeline_mode = #tpu.pipeline_mode<synchronous>, transform_indices = @transform_3, window_bounds = array<i64: 128, 4>}, {pipeline_mode = #tpu.pipeline_mode<synchronous>, transform_indices = @transform_4, window_bounds = array<i64: 1, 4>}, {transform_indices = @transform_5, window_bounds = array<i64: 8, 4>}, {transform_indices = @transform_6, window_bounds = array<i64: 8, 4>}, {transform_indices = @transform_7, window_bounds = array<i64: 8, 1>}]} {
    %c0 = arith.constant 0 : index
    %c0_0 = arith.constant 0 : index
    %0 = vector.load %arg1[%c0, %c0_0] : memref<8x16xbf16, #tpu.memory_space<vmem>>, vector<8x16xbf16>
    %c0_1 = arith.constant 0 : index
    %c0_2 = arith.constant 0 : index
    %1 = vector.load %arg2[%c0_1, %c0_2] : memref<16x128xbf16, #tpu.memory_space<vmem>>, vector<16x128xbf16>
    %cst = arith.constant dense<0.000000e+00> : vector<8x128xf32>
    %2 = tpu.matmul %0, %1, %cst {dimension_numbers = #tpu.dot_dimension_numbers<[1], [0], [0], [1], [0, 0, 1, 1], [], []>} : vector<8x16xbf16>, vector<16x128xbf16>, vector<8x128xf32> -> vector<8x128xf32>
    %c0_3 = arith.constant 0 : index
    %c0_4 = arith.constant 0 : index
    %3 = vector.load %arg3[%c0_3, %c0_4] : memref<1x128xf32, #tpu.memory_space<vmem>>, vector<1x128xf32>
    %4 = vector.broadcast %3 : vector<1x128xf32> to vector<8x128xf32>
    %5 = arith.addf %2, %4 : vector<8x128xf32>
    %cst_5 = arith.constant 0.000000e+00 : f32
    %6 = vector.broadcast %cst_5 : f32 to vector<8x128xf32>
    %7 = arith.cmpf oge, %5, %6 : vector<8x128xf32>
    %cst_6 = arith.constant 0.00999999977 : f32
    %8 = vector.broadcast %cst_6 : f32 to vector<8x128xf32>
    %9 = arith.mulf %8, %5 : vector<8x128xf32>
    %10 = arith.select %7, %5, %9 : vector<8x128xi1>, vector<8x128xf32>
    %11 = arith.truncf %10 : vector<8x128xf32> to vector<8x128xbf16>
    %c0_7 = arith.constant 0 : index
    %c0_8 = arith.constant 0 : index
    %12 = vector.load %arg4[%c0_7, %c0_8] : memref<128x4xbf16, #tpu.memory_space<vmem>>, vector<128x4xbf16>
    %cst_9 = arith.constant dense<0.000000e+00> : vector<8x4xf32>
    %13 = tpu.matmul %11, %12, %cst_9 {dimension_numbers = #tpu.dot_dimension_numbers<[1], [0], [0], [1], [0, 0, 1, 1], [], []>} : vector<8x128xbf16>, vector<128x4xbf16>, vector<8x4xf32> -> vector<8x4xf32>
    %c0_10 = arith.constant 0 : index
    %c0_11 = arith.constant 0 : index
    %14 = vector.load %arg5[%c0_10, %c0_11] : memref<1x4xf32, #tpu.memory_space<vmem>>, vector<1x4xf32>
    %15 = vector.broadcast %14 : vector<1x4xf32> to vector<8x4xf32>
    %16 = arith.addf %13, %15 : vector<8x4xf32>
    %cst_12 = arith.constant dense<0xFF800000> : vector<8xf32>
    %17 = vector.multi_reduction <maximumf>, %16, %cst_12 [1] : vector<8x4xf32> to vector<8xf32>
    %18 = vector.shape_cast %17 : vector<8xf32> to vector<8x1xf32>
    %19 = vector.broadcast %18 : vector<8x1xf32> to vector<8x4xf32>
    %20 = arith.subf %16, %19 : vector<8x4xf32>
    %21 = math.exp %20 : vector<8x4xf32>
    %cst_13 = arith.constant dense<0.000000e+00> : vector<8xf32>
    %22 = vector.multi_reduction <add>, %21, %cst_13 [1] : vector<8x4xf32> to vector<8xf32>
    %23 = vector.shape_cast %22 : vector<8xf32> to vector<8x1xf32>
    %24 = tpu.reciprocal %23 : vector<8x1xf32> -> vector<8x1xf32>
    %25 = vector.broadcast %24 : vector<8x1xf32> to vector<8x4xf32>
    %26 = arith.mulf %21, %25 : vector<8x4xf32>
    %c0_14 = arith.constant 0 : index
    %c0_15 = arith.constant 0 : index
    %27 = vector.load %arg7[%c0_14, %c0_15] : memref<8x4xf32, #tpu.memory_space<vmem>>, vector<8x4xf32>
    tpu.vector_store %arg7[%c0_14, %c0_15], %26 {strides = array<i32>} : memref<8x4xf32, #tpu.memory_space<vmem>>, vector<8x4xf32>,
    %c0_16 = arith.constant 0 : index
    %c0_17 = arith.constant 0 : index
    %28 = vector.load %arg6[%c0_16, %c0_17] : memref<8x4xf32, #tpu.memory_space<vmem>>, vector<8x4xf32>
    %cst_18 = arith.constant dense<0xFF800000> : vector<8xf32>
    %29 = vector.multi_reduction <maximumf>, %28, %cst_18 [1] : vector<8x4xf32> to vector<8xf32>
    %30 = vector.shape_cast %29 : vector<8xf32> to vector<8x1xf32>
    %31 = vector.broadcast %30 : vector<8x1xf32> to vector<8x4xf32>
    %32 = arith.subf %28, %31 : vector<8x4xf32>
    %33 = math.exp %32 : vector<8x4xf32>
    %cst_19 = arith.constant dense<0.000000e+00> : vector<8xf32>
    %34 = vector.multi_reduction <add>, %33, %cst_19 [1] : vector<8x4xf32> to vector<8xf32>
    %35 = vector.shape_cast %34 : vector<8xf32> to vector<8x1xf32>
    %36 = math.log %35 : vector<8x1xf32>
    %37 = arith.addf %30, %36 : vector<8x1xf32>
    %38 = vector.broadcast %37 : vector<8x1xf32> to vector<8x4xf32>
    %39 = arith.subf %28, %38 : vector<8x4xf32>
    %40 = arith.mulf %26, %39 : vector<8x4xf32>
    %cst_20 = arith.constant dense<0.000000e+00> : vector<8xf32>
    %41 = vector.multi_reduction <add>, %40, %cst_20 [1] : vector<8x4xf32> to vector<8xf32>
    %42 = vector.shape_cast %41 : vector<8xf32> to vector<8x1xf32>
    %cst_21 = arith.constant 0.000000e+00 : f32
    %43 = vector.broadcast %cst_21 : f32 to vector<8x1xf32>
    %44 = arith.subf %43, %42 : vector<8x1xf32>
    %c0_22 = arith.constant 0 : index
    %c0_23 = arith.constant 0 : index
    %45 = vector.load %arg8[%c0_22, %c0_23] : memref<8x1xf32, #tpu.memory_space<vmem>>, vector<8x1xf32>
    tpu.vector_store %arg8[%c0_22, %c0_23], %44 {strides = array<i32>} : memref<8x1xf32, #tpu.memory_space<vmem>>, vector<8x1xf32>,
    return
  }
  func.func @transform_0(%arg0: i32) -> (i32, i32) {
    %c0_i32 = arith.constant 0 : i32
    %c0_i32_0 = arith.constant 0 : i32
    return %arg0, %c0_i32 : i32, i32
  }
  func.func @transform_1(%arg0: i32) -> (i32, i32) {
    %c0_i32 = arith.constant 0 : i32
    %c0_i32_0 = arith.constant 0 : i32
    %c0_i32_1 = arith.constant 0 : i32
    return %c0_i32, %c0_i32_0 : i32, i32
  }
  func.func @transform_2(%arg0: i32) -> (i32, i32) {
    %c0_i32 = arith.constant 0 : i32
    %c0_i32_0 = arith.constant 0 : i32
    %c0_i32_1 = arith.constant 0 : i32
    return %c0_i32, %c0_i32_0 : i32, i32
  }
  func.func @transform_3(%arg0: i32) -> (i32, i32) {
    %c0_i32 = arith.constant 0 : i32
    %c0_i32_0 = arith.constant 0 : i32
    %c0_i32_1 = arith.constant 0 : i32
    return %c0_i32, %c0_i32_0 : i32, i32
  }
  func.func @transform_4(%arg0: i32) -> (i32, i32) {
    %c0_i32 = arith.constant 0 : i32
    %c0_i32_0 = arith.constant 0 : i32
    %c0_i32_1 = arith.constant 0 : i32
    return %c0_i32, %c0_i32_0 : i32, i32
  }
  func.func @transform_5(%arg0: i32) -> (i32, i32) {
    %c0_i32 = arith.constant 0 : i32
    %c0_i32_0 = arith.constant 0 : i32
    return %arg0, %c0_i32 : i32, i32
  }
  func.func @transform_6(%arg0: i32) -> (i32, i32) {
    %c0_i32 = arith.constant 0 : i32
    %c0_i32_0 = arith.constant 0 : i32
    return %arg0, %c0_i32 : i32, i32
  }
  func.func @transform_7(%arg0: i32) -> (i32, i32) {
    %c0_i32 = arith.constant 0 : i32
    %c0_i32_0 = arith.constant 0 : i32
    return %arg0, %c0_i32 : i32, i32
  }
}

</mosaic_0001>

<llo_original>
// kernel: tpu_custom_call.1
$region0: #{tpu_custom_call.1}
  #allocation0 [shape = 'u32[]', space=smem, size = 0x4, offset = 0x4, fixed_abs, tag = 'smem constant byte address 0x4 - core index']
  #allocation1 [shape = 'u32[72,128]{1,0:T(1,128)}', space=vmem, size = 0x9000, scoped, tag = 'internal scratch']
  %s0 = inlined_call_operand.vmem [shape: bf16[8,16], index: 0, kind: input, shape index: {}]
  %s1 = inlined_call_operand.vmem [shape: bf16[16,128], index: 1, kind: input, shape index: {}]
  %s2 = inlined_call_operand.vmem [shape: f32[1,128], index: 2, kind: input, shape index: {}]
  %s3 = inlined_call_operand.vmem [shape: bf16[128,4], index: 3, kind: input, shape index: {}]
  %s4 = inlined_call_operand.vmem [shape: f32[1,4], index: 4, kind: input, shape index: {}]
  %s5 = inlined_call_operand.vmem [shape: f32[8,4], index: 5, kind: input, shape index: {}]
  %s6 = inlined_call_operand.vmem [shape: f32[8,4], index: 6, kind: output, shape index: {0}]
  %s7 = inlined_call_operand.vmem [shape: f32[8,1], index: 7, kind: output, shape index: {1}]
  %8 = xla_tuple %s6, %s7
  %s9 = sld [smem:[#allocation0]]
  $region42: #{tpu_custom_call.1} parent=0
    _
  %s11 = ssub.s32 1, %s9
  %s12 = scalar_select 0, %s11, %s9
  // Predicated region
  $region2: #{tpu_custom_call.1} parent=0 // pred_check
    _
  $region3: #{tpu_custom_call.1} parent=0 // pred_check_branch
    %14 = sbr.rel (0) target = $region5
  $region4: #{tpu_custom_call.1} parent=0 // pred_region
    _
  $region5: #{tpu_custom_call.1} parent=0 // pred_fallthru
    _
  // Predicated region
  $region6: #{tpu_custom_call.1} parent=0 // pred_check
    _
  $region7: #{tpu_custom_call.1} parent=0 // pred_check_branch
    %16 = sbr.rel (0) target = $region9
  $region8: #{tpu_custom_call.1} parent=0 // pred_region
    _
  $region9: #{tpu_custom_call.1} parent=0 // pred_fallthru
    _
  // Predicated region
  $region10: #{tpu_custom_call.1} parent=0 // pred_check
    _
  $region11: #{tpu_custom_call.1} parent=0 // pred_check_branch
    %18 = sbr.rel (0) target = $region13
  $region12: #{tpu_custom_call.1} parent=0 // pred_region
    _
  $region13: #{tpu_custom_call.1} parent=0 // pred_fallthru
    _
  // Predicated region
  $region14: #{tpu_custom_call.1} parent=0 // pred_check
    _
  $region15: #{tpu_custom_call.1} parent=0 // pred_check_branch
    %20 = sbr.rel (0) target = $region17
  $region16: #{tpu_custom_call.1} parent=0 // pred_region
    _
  $region17: #{tpu_custom_call.1} parent=0 // pred_fallthru
    _
  // Predicated region
  $region18: #{tpu_custom_call.1} parent=0 // pred_check
    _
  $region19: #{tpu_custom_call.1} parent=0 // pred_check_branch
    %22 = sbr.rel (0) target = $region21
  $region20: #{tpu_custom_call.1} parent=0 // pred_region
    _
  $region21: #{tpu_custom_call.1} parent=0 // pred_fallthru
    _
  // Predicated region
  $region22: #{tpu_custom_call.1} parent=0 // pred_check
    _
  $region23: #{tpu_custom_call.1} parent=0 // pred_check_branch
    %24 = sbr.rel (0) target = $region25
  $region24: #{tpu_custom_call.1} parent=0 // pred_region
    _
  $region25: #{tpu_custom_call.1} parent=0 // pred_fallthru
    _
  %v26 = vld [vmem:[%s0] sm:$0xf]
  %v27 = vld [vmem:[%s1] sm:$0xf]
  %v28 = vld [vmem:[%s1 + $0x4] sm:$0xf]
  %v29 = vld [vmem:[%s2] sm:$0x1]
  %v31 = vperm.slane %v29, 0
  %v35 = vunpack.c.l.b16 %v27
  %v36 = vunpack.c.l.b16 %v28
  %v37 = vpack.c.b16 %v36, %v35
  %vm39 = vcmask 130048
  %v41 = vsel %vm39, %v26, 0
  %43 = vmatpush.bf16.msra.mxu0 0
  %44 = vmatpush.bf16.msra.mxu0 0
  %45 = vmatpush.bf16.msra.mxu0 0
  %46 = vmatpush.bf16.msra.mxu0 0
  %47 = vmatpush.bf16.msra.mxu0 0
  %48 = vmatpush.bf16.msra.mxu0 0
  %49 = vmatpush.bf16.msra.mxu0 0
  %50 = vmatpush.bf16.msra.mxu0 %v37
  %51 = vmatmul.bf16.gmra.mxu0 %v41
  %v52 = vpop.f32.mrf.mxu0
  %v53 = vadd.f32 %v31, %v52
  %v54 = vpop.f32.mrf.mxu0
  %55 = vdwg.mxu0
  %vm56 = vcmp.ge.f32.partialorder %v53, 0.0
  %v57 = vmul.f32 %v53, 0.01
  %v58 = vsel %vm56, %v53, %v57
  %v59 = vpack.c.bf16 %v58, %v58
  %v60 = vld [vmem:[%s3] sm:$0xf]
  %v61 = vld [vmem:[%s3 + $0x4] sm:$0xf]
  %v62 = vld [vmem:[%s3 + $0x8] sm:$0xf]
  %v63 = vld [vmem:[%s3 + $0xc] sm:$0xf]
  %v64 = vld [vmem:[%s3 + $0x10] sm:$0xf]
  %v65 = vld [vmem:[%s3 + $0x14] sm:$0xf]
  %v66 = vld [vmem:[%s3 + $0x18] sm:$0xf]
  %v67 = vld [vmem:[%s3 + $0x1c] sm:$0xf]
  %v68 = vld [vmem:[%s3 + $0x20] sm:$0xf]
  %v69 = vld [vmem:[%s3 + $0x24] sm:$0xf]
  %v70 = vld [vmem:[%s3 + $0x28] sm:$0xf]
  %v71 = vld [vmem:[%s3 + $0x2c] sm:$0xf]
  %v72 = vld [vmem:[%s3 + $0x30] sm:$0xf]
  %v73 = vld [vmem:[%s3 + $0x34] sm:$0xf]
  %v74 = vld [vmem:[%s3 + $0x38] sm:$0xf]
  %v75 = vld [vmem:[%s3 + $0x3c] sm:$0xf]
  %v76 = vld [vmem:[%s4] sm:$0x1]
  %v78 = vperm.slane %v76, 0
  %v96 = vunpack.c.l.b16 %v60
  %v97 = vunpack.c.l.b16 %v61
  %v98 = vunpack.c.l.b16 %v62
  %v99 = vunpack.c.l.b16 %v63
  %v100 = vunpack.c.l.b16 %v64
  %v101 = vunpack.c.l.b16 %v65
  %v102 = vunpack.c.l.b16 %v66
  %v103 = vunpack.c.l.b16 %v67
  %v104 = vunpack.c.l.b16 %v68
  %v105 = vunpack.c.l.b16 %v69
  %v106 = vunpack.c.l.b16 %v70
  %v107 = vunpack.c.l.b16 %v71
  %v108 = vunpack.c.l.b16 %v72
  %v109 = vunpack.c.l.b16 %v73
  %v110 = vunpack.c.l.b16 %v74
  %v111 = vunpack.c.l.b16 %v75
  %v112 = vpack.c.b16 %v97, %v96
  %v113 = vpack.c.b16 %v99, %v98
  %v114 = vpack.c.b16 %v101, %v100
  %v115 = vpack.c.b16 %v103, %v102
  %v116 = vpack.c.b16 %v105, %v104
  %v117 = vpack.c.b16 %v107, %v106
  %v118 = vpack.c.b16 %v109, %v108
  %v119 = vpack.c.b16 %v111, %v110
  %128 = vmatpush.bf16.msra.mxu0 %v119
  %129 = vmatpush.bf16.msra.mxu0 %v118
  %130 = vmatpush.bf16.msra.mxu0 %v117
  %131 = vmatpush.bf16.msra.mxu0 %v116
  %132 = vmatpush.bf16.msra.mxu0 %v115
  %133 = vmatpush.bf16.msra.mxu0 %v114
  %134 = vmatpush.bf16.msra.mxu0 %v113
  %135 = vmatpush.bf16.msra.mxu0 %v112
  %136 = vmatmul.bf16.gmra.mxu0 %v59
  %v137 = vpop.f32.mrf.mxu0
  %v138 = vadd.f32 %v78, %v137
  %v139 = vpop.f32.mrf.mxu0
  %140 = vdwg.mxu0
  %vm141 = vcmask 31744
  %v142 = vsel %vm141, %v138, -inf
  %143 = vmax.xlane.f32.xlu0 %v142
  %v144 = vpop.xlane.xlu0 %143
  %v145 = vsub.f32 %v138, %v144
  %v146 = vmul.f32 %v145, 1.442695
  %v147 = vpow.pop %v146
  %v148 = vsel %vm141, %v147, 0.0
  %149 = vadd.xlane.f32.xlu0 %v148
  %v150 = vpop.xlane.xlu0 %149
  %v151 = vrcp.pop %v150
  %v152 = vmul.f32 %v150, %v151
  %v153 = vsub.f32 1.0, %v152
  %v154 = vmul.f32 %v151, %v153
  %v155 = vadd.f32 %v151, %v154
  %vm156 = vweird.f32 %v150
  %vm157 = vweird.f32 %v151
  %vm158 = vmor %vm156, %vm157
  %v159 = vsel %vm158, %v151, %v155
  %v160 = vand.u32 2147483647, %v150
  %vm161 = vcmp.eq.f32.partialorder %v160, 8.507059e+37
  %v162 = vand.u32 %v150, 2147483648
  %v163 = vor.u32 1.1754944e-38, %v162
  %v164 = vsel %vm161, %v163, %v159
  %v165 = vmul.f32 %v147, %v164
  %166 = vst.msk [vmem:[%s6] sm:$0xff] %vm141, %v165
  %v167 = vld [vmem:[%s5] sm:$0xff]
  %v168 = vsel %vm141, %v167, -inf
  %169 = vmax.xlane.f32.xlu0 %v168
  %v170 = vpop.xlane.xlu0 %169
  %v171 = vsub.f32 %v167, %v170
  %v172 = vmul.f32 %v171, 1.442695
  %v173 = vpow.pop %v172
  %v174 = vsel %vm141, %v173, 0.0
  %175 = vadd.xlane.f32.xlu0 %v174
  %v176 = vpop.xlane.xlu0 %175
  %v177 = vlog2.pop %v176
  %v178 = vmul.f32 %v177, 0.6931472
  %v179 = vadd.f32 %v170, %v178
  %v180 = vsub.f32 %v167, %v179
  %v181 = vmul.f32 %v165, %v180
  %v182 = vsel %vm141, %v181, 0.0
  %183 = vadd.xlane.f32.xlu0 %v182
  %v184 = vpop.xlane.xlu0 %183
  %v185 = vsub.f32 0.0, %v184
  %vm186 = vcmask 7168
  %187 = vst.msk [vmem:[%s7] sm:$0xff] %vm186, %v185
  // Predicated region
  $region26: #{tpu_custom_call.1} parent=0 // pred_check
    _
  $region27: #{tpu_custom_call.1} parent=0 // pred_check_branch
    %189 = sbr.rel (0) target = $region29
  $region28: #{tpu_custom_call.1} parent=0 // pred_region
    _
  $region29: #{tpu_custom_call.1} parent=0 // pred_fallthru
    _
  // Predicated region
  $region30: #{tpu_custom_call.1} parent=0 // pred_check
    _
  $region31: #{tpu_custom_call.1} parent=0 // pred_check_branch
    %191 = sbr.rel (0) target = $region33
  $region32: #{tpu_custom_call.1} parent=0 // pred_region
    _
  $region33: #{tpu_custom_call.1} parent=0 // pred_fallthru
    _
  // Predicated region
  $region34: #{tpu_custom_call.1} parent=0 // pred_check
    _
  $region35: #{tpu_custom_call.1} parent=0 // pred_check_branch
    %193 = sbr.rel (0) target = $region37
  $region36: #{tpu_custom_call.1} parent=0 // pred_region
    _
  $region37: #{tpu_custom_call.1} parent=0 // pred_fallthru
    _
  // Predicated region
  $region38: #{tpu_custom_call.1} parent=0 // pred_check
    _
  $region39: #{tpu_custom_call.1} parent=0 // pred_check_branch
    %195 = sbr.rel (0) target = $region41
  $region40: #{tpu_custom_call.1} parent=0 // pred_region
    _
  $region41: #{tpu_custom_call.1} parent=0 // pred_fallthru
    _

</llo_original>
